<compile_context>
chip_gen: v5e
topology: v5e:2x2
jax: 0.10.0
libtpu: 0.0.40
codegen_flags: <defaults>
</compile_context>

<pallas_src>
import functools

import jax
import jax.numpy as jnp
from jax import lax
from jax.experimental import pallas as pl
from jax.experimental.pallas import tpu as pltpu


# ----------------------------------------------------------------------------
# Static-exponent helpers (VPU-only where possible, keep the EUP slot free).
# ----------------------------------------------------------------------------
def _int_pow(x, e):
    """x**e for positive integer e via binary exponentiation (VPU multiplies)."""
    result = None
    base = x
    while e > 0:
        if e & 1:
            result = base if result is None else result * base
        e >>= 1
        if e:
            base = base * base
    return result


def _pow_static(xc, sp):
    """xc**sp for a compile-time-constant sp, avoiding exp/log when possible."""
    sp = float(sp)
    if sp == float(int(sp)) and 1 <= int(sp) <= 64:
        return _int_pow(xc, int(sp))                     # pure VPU
    two_sp = 2.0 * sp
    if two_sp == float(int(two_sp)) and 1 <= int(two_sp) <= 64:
        return _int_pow(jnp.sqrt(xc), int(two_sp))       # one EUP sqrt, no exp/log
    return jnp.exp(jnp.float32(sp) * jnp.log(xc))        # general fallback


# ----------------------------------------------------------------------------
# Fused kernel: masked GeM pooling (+ optional Linear) for one batch element,
# tiled over the (padded) spatial axis N.
#   grid = (B, N_pad // Nt); reduction axis (N tiles) last, marked "arbitrary".
# ----------------------------------------------------------------------------
def _gem_mask_kernel(p_ref, x_ref, m_ref, *rest, eps, static_p, has_fc):
    if has_fc:
        wt_ref, b_ref, o_ref, s_acc, c_acc = rest
    else:
        wt_ref = b_ref = None
        o_ref, s_acc, c_acc = rest

    k = pl.program_id(1)
    nk = pl.num_programs(1)

    @pl.when(k == 0)
    def _init():
        s_acc[...] = jnp.zeros_like(s_acc)
        c_acc[...] = jnp.zeros_like(c_acc)

    # x may arrive as bf16 (wrapper-side cast halves the binding HBM DMA);
    # all arithmetic stays f32 (v5e has no bf16 VALU/EUP).
    x2 = x_ref[0].astype(jnp.float32)   # (C, Nt)
    m2 = m_ref[0]                       # (1, Nt) f32 in {0.0, 1.0}; 0 on padding

    xc = jnp.maximum(x2, eps)           # x.clamp(min=eps)

    # x.pow(p): static-p path is transcendental-free for (half-)integer p.
    if static_p is not None:
        xp = _pow_static(xc, static_p)
    else:
        # Traced learnable exponent (training-of-p only): 2 EUP ops / element.
        p = p_ref[0]
        xp = jnp.exp(p * jnp.log(xc))

    # Mask + reduce over the N tile in one MXU contraction:
    #   (1, Nt) x (C, Nt) contracting the last dims -> (1, C), lane-dense.
    # (Padding columns have mask 0 so they contribute nothing.)
    s_part = lax.dot_general(
        m2, xp, (((1,), (1,)), ((), ())), preferred_element_type=jnp.float32
    )
    s_acc[...] += s_part
    c_acc[...] += jnp.sum(m2, axis=-1, keepdims=True)    # (1, 1) valid count

    @pl.when(k == nk - 1)
    def _finalize():
        # NOTE: an all-False mask row yields NaN (0/0), matching the PyTorch
        # module's division-by-zero-count behavior.
        mean = s_acc[...] / c_acc[...]                   # (1, C)
        if static_p is not None:
            sp = float(static_p)
            if sp == 1.0:
                pooled = mean
            elif sp == 2.0:
                pooled = jnp.sqrt(mean)
            else:
                pooled = jnp.exp(jnp.log(mean) * jnp.float32(1.0 / sp))
        else:
            pooled = jnp.exp(jnp.log(mean) * (1.0 / p_ref[0]))
        if has_fc:
            y = (
                jnp.dot(pooled, wt_ref[...], preferred_element_type=jnp.float32)
                + b_ref[...]
            )                                            # (1, Cout)
            o_ref[...] = y[None]
        else:
            o_ref[...] = pooled[None]


# ----------------------------------------------------------------------------
# Generation-aware tiling.
# ----------------------------------------------------------------------------
def _vmem_budget_bytes():
    """Conservative scoped-VMEM budget per generation (v5e ~16 MiB default
    scoped limit -> 12 MiB budget; v6e/v7x 32 MiB default -> 20 MiB budget)."""
    kind = ""
    try:
        kind = jax.devices()[0].device_kind.lower()
    except Exception:
        pass
    if "v5" in kind:
        return 12 << 20
    return 20 << 20


def _pick_n_tile(n_padded, c, x_itemsize):
    """Largest N tile (multiple of 128, divides n_padded) whose working set
    (2 double-buffered x blocks + ~2 f32 temporaries xc/xp) fits the budget."""
    budget = _vmem_budget_bytes()
    per_col = c * (2 * x_itemsize + 2 * 4)
    max_cols = budget // max(per_col, 1)
    max_cols = min(2048, max(128, (max_cols // 128) * 128))
    if n_padded <= max_cols:
        return n_padded
    for t in range(max_cols, 127, -128):
        if n_padded % t == 0:
            return t
    return 128  # n_padded is a multiple of 128, so this always divides


# ----------------------------------------------------------------------------
# pallas_call wrapper.
# ----------------------------------------------------------------------------
def gem_mask_pool_fc(x_flat, mask_f, p, wt=None, b=None, *, eps, static_p=None):
    """x_flat: (B, C, N) any float dtype; mask_f: (B, N) f32 0/1; p: (1,) f32;
    wt: optional (Cin, Cout) pre-transposed FC weight; b: optional (Cout,)."""
    B, C, N = x_flat.shape

    # Pad N up to a multiple of 128 (zero mask => exact) so every shape tiles.
    N_pad = ((N + 127) // 128) * 128
    if N_pad != N:
        x_flat = jnp.pad(x_flat, ((0, 0), (0, 0), (0, N_pad - N)))
        mask_f = jnp.pad(mask_f, ((0, 0), (0, N_pad - N)))

    tn = _pick_n_tile(N_pad, C, jnp.dtype(x_flat.dtype).itemsize)
    nk = N_pad // tn
    has_fc = wt is not None
    Cout = wt.shape[1] if has_fc else C

    in_specs = [
        pl.BlockSpec(memory_space=pltpu.SMEM),                 # p (whole (1,) array)
        pl.BlockSpec((1, C, tn), lambda bi, k: (bi, 0, k)),    # x tile
        pl.BlockSpec((1, 1, tn), lambda bi, k: (bi, 0, k)),    # mask tile
    ]
    args = [p, x_flat, mask_f.reshape(B, 1, N_pad)]
    if has_fc:
        in_specs += [
            pl.BlockSpec((C, Cout), lambda bi, k: (0, 0)),     # W^T, VMEM-resident
            pl.BlockSpec((1, Cout), lambda bi, k: (0, 0)),     # bias
        ]
        args += [wt, b.reshape(1, Cout)]

    out = pl.pallas_call(
        functools.partial(
            _gem_mask_kernel, eps=eps, static_p=static_p, has_fc=has_fc
        ),
        out_shape=jax.ShapeDtypeStruct((B, 1, Cout), jnp.float32),
        grid=(B, nk),
        in_specs=in_specs,
        out_specs=pl.BlockSpec((1, 1, Cout), lambda bi, k: (bi, 0, 0)),
        scratch_shapes=[
            pltpu.VMEM((1, C), jnp.float32),   # running masked sum
            pltpu.VMEM((1, 1), jnp.float32),   # running mask count
        ],
        compiler_params=pltpu.CompilerParams(
            dimension_semantics=("parallel", "arbitrary")
        ),
    )(*args)
    return out.reshape(B, Cout)


# ----------------------------------------------------------------------------
# Module-equivalent forward.
# ----------------------------------------------------------------------------
def gem_mask_forward(x, mask, params, *, eps, static_p=None,
                     input_cast_dtype=None, fc_fuse_max_batch=64):
    """x: (B, C, H, W) or (B, C, N); mask: (B, H, W) or (B, N) bool.

    params: {"p": (1,) f32, optionally "fc_wt": (Cin, Cout) pre-transposed weight
             and "fc_b": (Cout,)}.
    static_p:          compile-time constant exponent -> transcendental-free path.
    input_cast_dtype:  e.g. jnp.bfloat16 to halve the x HBM DMA (compute stays f32).
    fc_fuse_max_batch: above this batch size the Linear runs as one batched XLA
                       matmul on the pooled (B,C) output instead of per-batch M=1
                       matmuls inside the kernel's finalize branch.
    """
    B, C = x.shape[0], x.shape[1]
    x_flat = x.reshape(B, C, -1)                      # torch.flatten(x, 2)
    if input_cast_dtype is not None and x_flat.dtype != input_cast_dtype:
        x_flat = x_flat.astype(input_cast_dtype)      # cheaper DMA, f32 math in-kernel
    mask_f = mask.reshape(B, -1).astype(jnp.float32)  # torch.flatten(mask, 1)

    wt = params.get("fc_wt")                          # W^T stored once at init
    b = params.get("fc_b")
    has_fc = wt is not None
    fuse_fc = has_fc and B <= fc_fuse_max_batch

    # TODO(synk): final_fc == 2 (Linear + BatchNorm1d) variant not implemented.
    # TODO(synk): v7x megacore split of the N reduction for B < num_cores not implemented.
    pooled = gem_mask_pool_fc(
        x_flat, mask_f, params["p"],
        wt if fuse_fc else None, b if fuse_fc else None,
        eps=eps, static_p=static_p,
    )
    if has_fc and not fuse_fc:
        pooled = pooled @ wt + b                      # one batched MXU matmul (XLA)
    return pooled


# Pure-JAX reference for verification.
def _reference(x, mask, p, eps, w, b):
    B, C = x.shape[0], x.shape[1]
    xf = x.reshape(B, C, -1).astype(jnp.float32)
    mf = mask.reshape(B, -1)
    xp = jnp.clip(xf, min=eps) ** p[0]
    xp = jnp.where(mf[:, None, :], xp, 0.0)
    s = xp.sum(-1)
    cnt = jnp.count_nonzero(mf, axis=-1).astype(jnp.float32)
    out = (s / cnt[:, None]) ** (1.0 / p[0])
    if w is not None:
        out = out @ w.T + b
    return out


if __name__ == "__main__":
    key = jax.random.PRNGKey(0)
    k_x, k_m, k_w, k_b, k_x2, k_m2 = jax.random.split(key, 6)

    EPS = 1e-6
    P = 3.0                              # nn.Parameter(torch.ones(1) * p)
    C = 256                              # required by final_fc Linear(256, 256)

    fc_w = jax.random.normal(k_w, (256, 256), jnp.float32) * 0.02
    fc_b = jax.random.normal(k_b, (256,), jnp.float32) * 0.01
    params = {
        "p": jnp.ones((1,), jnp.float32) * P,
        "fc_wt": jnp.transpose(fc_w),    # W^T hoisted once at init (not per call)
        "fc_b": fc_b,
    }

    # Case 1: N = 16*16 = 256 (multiple of 128), fused FC.
    B, H, W = 2, 16, 16
    x = jax.random.normal(k_x, (B, C, H, W), jnp.float32)
    mask = jax.random.bernoulli(k_m, 0.7, (B, H, W))
    mask = mask.at[:, 0, 0].set(True)    # guarantee >=1 valid position per batch
    ref = _reference(x, mask, params["p"], EPS, fc_w, fc_b)

    out_static = gem_mask_forward(x, mask, params, eps=EPS, static_p=P)
    out_traced = gem_mask_forward(x, mask, params, eps=EPS, static_p=None)
    # bf16-DMA path; compare against the reference on the same quantized input.
    out_bf16 = gem_mask_forward(
        x, mask, params, eps=EPS, static_p=P, input_cast_dtype=jnp.bfloat16
    )
    ref_bf16 = _reference(
        x.astype(jnp.bfloat16).astype(jnp.float32), mask, params["p"], EPS, fc_w, fc_b
    )

    # Case 2: N = 14*14 = 196 (NOT a multiple of 128) -> exercises the zero-pad
    # path; force the unfused (batched XLA) FC path as well.
    B2, H2, W2 = 3, 14, 14
    x2 = jax.random.normal(k_x2, (B2, C, H2, W2), jnp.float32)
    mask2 = jax.random.bernoulli(k_m2, 0.6, (B2, H2, W2))
    mask2 = mask2.at[:, 0, 0].set(True)
    out_pad = gem_mask_forward(
        x2, mask2, params, eps=EPS, static_p=P, fc_fuse_max_batch=1
    )
    ref_pad = _reference(x2, mask2, params["p"], EPS, fc_w, fc_b)

    out_static, out_traced, out_bf16, out_pad = jax.block_until_ready(
        (out_static, out_traced, out_bf16, out_pad)
    )

    assert out_static.shape == (B, 256) and out_pad.shape == (B2, 256)
    assert jnp.allclose(out_static, ref, rtol=1e-4, atol=1e-4), (
        f"static-p max abs err {jnp.max(jnp.abs(out_static - ref))}"
    )
    assert jnp.allclose(out_traced, ref, rtol=1e-4, atol=1e-4), (
        f"traced-p max abs err {jnp.max(jnp.abs(out_traced - ref))}"
    )
    assert jnp.allclose(out_bf16, ref_bf16, rtol=2e-3, atol=2e-3), (
        f"bf16-DMA max abs err {jnp.max(jnp.abs(out_bf16 - ref_bf16))}"
    )
    assert jnp.allclose(out_pad, ref_pad, rtol=1e-4, atol=1e-4), (
        f"padded-N max abs err {jnp.max(jnp.abs(out_pad - ref_pad))}"
    )
    print("KERNEL_OK")
</pallas_src>

<mosaic_0001>
module attributes {stable_mosaic.version = 11 : i64} {
  func.func @_gem_mask_kernel(%arg0: i32, %arg1: i32, %arg2: memref<1xf32, #tpu.memory_space<smem>>, %arg3: memref<1x256x256xf32, #tpu.memory_space<vmem>>, %arg4: memref<1x1x256xf32, #tpu.memory_space<vmem>>, %arg5: memref<256x256xf32, #tpu.memory_space<vmem>>, %arg6: memref<1x256xf32, #tpu.memory_space<vmem>>, %arg7: memref<1x1x256xf32, #tpu.memory_space<vmem>>, %arg8: memref<1x256xf32, #tpu.memory_space<vmem>>, %arg9: memref<1x1xf32, #tpu.memory_space<vmem>>) attributes {dimension_semantics = [#tpu.dimension_semantics<parallel>, #tpu.dimension_semantics<arbitrary>], iteration_bounds = array<i64: 2, 1>, scalar_prefetch = 0 : i64, scratch_operands = 2 : i64, tpu.core_type = #tpu.core_type<tc>, window_params = [{transform_indices = @transform_0, window_bounds = array<i64: 1>}, {transform_indices = @transform_1, window_bounds = array<i64: 1, 256, 256>}, {transform_indices = @transform_2, window_bounds = array<i64: 1, 1, 256>}, {pipeline_mode = #tpu.pipeline_mode<synchronous>, transform_indices = @transform_3, window_bounds = array<i64: 256, 256>}, {pipeline_mode = #tpu.pipeline_mode<synchronous>, transform_indices = @transform_4, window_bounds = array<i64: 1, 256>}, {transform_indices = @transform_5, window_bounds = array<i64: 1, 1, 256>}]} {
    %c0_i32 = arith.constant 0 : i32
    %0 = arith.cmpi eq, %arg1, %c0_i32 : i32
    %1 = arith.extui %0 : i1 to i32
    %c0_i32_0 = arith.constant 0 : i32
    %2 = arith.cmpi ne, %1, %c0_i32_0 : i32
    scf.if %2 {
      %cst_18 = arith.constant 0.000000e+00 : f32
      %23 = vector.broadcast %cst_18 : f32 to vector<1x256xf32>
      %c0_19 = arith.constant 0 : index
      %c0_20 = arith.constant 0 : index
      %24 = vector.load %arg8[%c0_19, %c0_20] : memref<1x256xf32, #tpu.memory_space<vmem>>, vector<1x256xf32>
      tpu.vector_store %arg8[%c0_19, %c0_20], %23 {strides = array<i32>} : memref<1x256xf32, #tpu.memory_space<vmem>>, vector<1x256xf32>,
      %cst_21 = arith.constant 0.000000e+00 : f32
      %25 = vector.broadcast %cst_21 : f32 to vector<1x1xf32>
      %c0_22 = arith.constant 0 : index
      %c0_23 = arith.constant 0 : index
      %26 = vector.load %arg9[%c0_22, %c0_23] : memref<1x1xf32, #tpu.memory_space<vmem>>, vector<1x1xf32>
      tpu.vector_store %arg9[%c0_22, %c0_23], %25 {strides = array<i32>} : memref<1x1xf32, #tpu.memory_space<vmem>>, vector<1x1xf32>,
    } else {
    }
    %c0 = arith.constant 0 : index
    %c0_1 = arith.constant 0 : index
    %c0_2 = arith.constant 0 : index
    %3 = vector.load %arg3[%c0, %c0_1, %c0_2] : memref<1x256x256xf32, #tpu.memory_space<vmem>>, vector<1x256x256xf32>
    %4 = vector.shape_cast %3 : vector<1x256x256xf32> to vector<256x256xf32>
    %c0_3 = arith.constant 0 : index
    %c0_4 = arith.constant 0 : index
    %c0_5 = arith.constant 0 : index
    %5 = vector.load %arg4[%c0_3, %c0_4, %c0_5] : memref<1x1x256xf32, #tpu.memory_space<vmem>>, vector<1x1x256xf32>
    %6 = vector.shape_cast %5 : vector<1x1x256xf32> to vector<1x256xf32>
    %cst = arith.constant 9.99999997E-7 : f32
    %7 = vector.broadcast %cst : f32 to vector<256x256xf32>
    %8 = arith.maximumf %4, %7 : vector<256x256xf32>
    %9 = arith.mulf %8, %8 : vector<256x256xf32>
    %10 = arith.mulf %8, %9 : vector<256x256xf32>
    %cst_6 = arith.constant dense<0.000000e+00> : vector<1x256xf32>
    %11 = tpu.matmul %6, %10, %cst_6 {dimension_numbers = #tpu.dot_dimension_numbers<[1], [1], [0], [0], [0, 0, 1, 0], [], []>} : vector<1x256xf32>, vector<256x256xf32>, vector<1x256xf32> -> vector<1x256xf32>
    %c0_7 = arith.constant 0 : index
    %c0_8 = arith.constant 0 : index
    %12 = vector.load %arg8[%c0_7, %c0_8] : memref<1x256xf32, #tpu.memory_space<vmem>>, vector<1x256xf32>
    %13 = arith.addf %12, %11 : vector<1x256xf32>
    %c0_9 = arith.constant 0 : index
    %c0_10 = arith.constant 0 : index
    %14 = vector.load %arg8[%c0_9, %c0_10] : memref<1x256xf32, #tpu.memory_space<vmem>>, vector<1x256xf32>
    tpu.vector_store %arg8[%c0_9, %c0_10], %13 {strides = array<i32>} : memref<1x256xf32, #tpu.memory_space<vmem>>, vector<1x256xf32>,
    %c0_11 = arith.constant 0 : index
    %c0_12 = arith.constant 0 : index
    %15 = vector.load %arg9[%c0_11, %c0_12] : memref<1x1xf32, #tpu.memory_space<vmem>>, vector<1x1xf32>
    %cst_13 = arith.constant dense<0.000000e+00> : vector<1xf32>
    %16 = vector.multi_reduction <add>, %6, %cst_13 [1] : vector<1x256xf32> to vector<1xf32>
    %17 = vector.shape_cast %16 : vector<1xf32> to vector<1x1xf32>
    %18 = arith.addf %15, %17 : vector<1x1xf32>
    %c0_14 = arith.constant 0 : index
    %c0_15 = arith.constant 0 : index
    %19 = vector.load %arg9[%c0_14, %c0_15] : memref<1x1xf32, #tpu.memory_space<vmem>>, vector<1x1xf32>
    tpu.vector_store %arg9[%c0_14, %c0_15], %18 {strides = array<i32>} : memref<1x1xf32, #tpu.memory_space<vmem>>, vector<1x1xf32>,
    %c0_i32_16 = arith.constant 0 : i32
    %20 = arith.cmpi eq, %arg1, %c0_i32_16 : i32
    %21 = arith.extui %20 : i1 to i32
    %c0_i32_17 = arith.constant 0 : i32
    %22 = arith.cmpi ne, %21, %c0_i32_17 : i32
    scf.if %22 {
      %c0_18 = arith.constant 0 : index
      %c0_19 = arith.constant 0 : index
      %23 = vector.load %arg8[%c0_18, %c0_19] : memref<1x256xf32, #tpu.memory_space<vmem>>, vector<1x256xf32>
      %c0_20 = arith.constant 0 : index
      %c0_21 = arith.constant 0 : index
      %24 = vector.load %arg9[%c0_20, %c0_21] : memref<1x1xf32, #tpu.memory_space<vmem>>, vector<1x1xf32>
      %25 = vector.broadcast %24 : vector<1x1xf32> to vector<1x256xf32>
      %26 = arith.divf %23, %25 : vector<1x256xf32>
      %27 = math.log %26 : vector<1x256xf32>
      %cst_22 = arith.constant 0.333333343 : f32
      %28 = vector.broadcast %cst_22 : f32 to vector<1x256xf32>
      %29 = arith.mulf %27, %28 : vector<1x256xf32>
      %30 = math.exp %29 : vector<1x256xf32>
      %c0_23 = arith.constant 0 : index
      %c0_24 = arith.constant 0 : index
      %31 = vector.load %arg5[%c0_23, %c0_24] : memref<256x256xf32, #tpu.memory_space<vmem>>, vector<256x256xf32>
      %cst_25 = arith.constant dense<0.000000e+00> : vector<1x256xf32>
      %32 = tpu.matmul %30, %31, %cst_25 {dimension_numbers = #tpu.dot_dimension_numbers<[1], [0], [0], [1], [0, 0, 1, 1], [], []>} : vector<1x256xf32>, vector<256x256xf32>, vector<1x256xf32> -> vector<1x256xf32>
      %c0_26 = arith.constant 0 : index
      %c0_27 = arith.constant 0 : index
      %33 = vector.load %arg6[%c0_26, %c0_27] : memref<1x256xf32, #tpu.memory_space<vmem>>, vector<1x256xf32>
      %34 = arith.addf %32, %33 : vector<1x256xf32>
      %35 = vector.shape_cast %34 : vector<1x256xf32> to vector<1x1x256xf32>
      %c0_28 = arith.constant 0 : index
      %c0_29 = arith.constant 0 : index
      %c0_30 = arith.constant 0 : index
      %36 = vector.load %arg7[%c0_28, %c0_29, %c0_30] : memref<1x1x256xf32, #tpu.memory_space<vmem>>, vector<1x1x256xf32>
      tpu.vector_store %arg7[%c0_28, %c0_29, %c0_30], %35 {strides = array<i32>} : memref<1x1x256xf32, #tpu.memory_space<vmem>>, vector<1x1x256xf32>,
    } else {
    }
    return
  }
  func.func @transform_0(%arg0: i32, %arg1: i32) -> i32 {
    %c0_i32 = arith.constant 0 : i32
    %c0_i32_0 = arith.constant 0 : i32
    return %c0_i32 : i32
  }
  func.func @transform_1(%arg0: i32, %arg1: i32) -> (i32, i32, i32) {
    %c0_i32 = arith.constant 0 : i32
    %c0_i32_0 = arith.constant 0 : i32
    return %arg0, %c0_i32, %arg1 : i32, i32, i32
  }
  func.func @transform_2(%arg0: i32, %arg1: i32) -> (i32, i32, i32) {
    %c0_i32 = arith.constant 0 : i32
    %c0_i32_0 = arith.constant 0 : i32
    return %arg0, %c0_i32, %arg1 : i32, i32, i32
  }
  func.func @transform_3(%arg0: i32, %arg1: i32) -> (i32, i32) {
    %c0_i32 = arith.constant 0 : i32
    %c0_i32_0 = arith.constant 0 : i32
    %c0_i32_1 = arith.constant 0 : i32
    return %c0_i32, %c0_i32_0 : i32, i32
  }
  func.func @transform_4(%arg0: i32, %arg1: i32) -> (i32, i32) {
    %c0_i32 = arith.constant 0 : i32
    %c0_i32_0 = arith.constant 0 : i32
    %c0_i32_1 = arith.constant 0 : i32
    return %c0_i32, %c0_i32_0 : i32, i32
  }
  func.func @transform_5(%arg0: i32, %arg1: i32) -> (i32, i32, i32) {
    %c0_i32 = arith.constant 0 : i32
    %c0_i32_0 = arith.constant 0 : i32
    %c0_i32_1 = arith.constant 0 : i32
    return %arg0, %c0_i32, %c0_i32_0 : i32, i32, i32
  }
}

</mosaic_0001>

<llo_original>
// kernel: tpu_custom_call.1
$region0: #{tpu_custom_call.1}
  #allocation0 [shape = 'u32[]', space=smem, size = 0x4, offset = 0x4, fixed_abs, tag = 'smem constant byte address 0x4 - core index']
  #allocation1 [shape = 'u32[72,128]{1,0:T(1,128)}', space=vmem, size = 0x9000, scoped, tag = 'internal scratch']
  #allocation2 [shape = 'f32[1,256]{1,0:T(1,128)}', space=vmem, size = 0x400, scoped, tag = 'scratch operand']
  #allocation3 [shape = 'f32[1,1]{1,0:T(1,128)}', space=vmem, size = 0x200, scoped, tag = 'scratch operand']
  #allocation4 [shape = 'f32[1]{0:T(128)S(6)}', space=smem, size = 0x200, scoped, tag = 'scoped memory for tpu_custom_call.1']
  %s0 = inlined_call_operand.<no memory space> [shape: f32[1], index: 0, kind: input, shape index: {}]
  %s1 = inlined_call_operand.hbm [shape: f32[2,256,256], index: 1, kind: input, shape index: {}]
  %s2 = inlined_call_operand.hbm [shape: f32[2,1,256], index: 2, kind: input, shape index: {}]
  %s3 = inlined_call_operand.hbm [shape: f32[256,256], index: 3, kind: input, shape index: {}]
  %s4 = inlined_call_operand.vmem [shape: f32[1,256], index: 4, kind: input, shape index: {}]
  %s5 = inlined_call_operand.hbm [shape: f32[2,1,256], index: 5, kind: output, shape index: {}]
  %s6 = sld [smem:[#allocation0]]
  $region73: #{tpu_custom_call.1} parent=0
    _
  %s8 = ssub.s32 1, %s6
  %s9 = scalar_select 0, %s8, %s6
  %10 = sst [smem:[#allocation4]] %s0
  $region1: #{tpu_custom_call.1} parent=0
    #allocation5 [shape = 'u8[524288]{0}', space=vmem, size = 0x80000, scoped, tag = 'input window, operand 1']
    #allocation6 [shape = 's32[2]{0}', space=sflag, size = 0x8, scoped, tag = 'scoped memory for tpu_custom_call.1']
    #allocation7 [shape = 's32[2]{0}', space=sflag, size = 0x8, scoped, tag = 'scoped memory for tpu_custom_call.1']
    #allocation8 [shape = 'u8[2048]{0}', space=vmem, size = 0x800, scoped, tag = 'input window, operand 2']
    #allocation9 [shape = 's32[2]{0}', space=sflag, size = 0x8, scoped, tag = 'scoped memory for tpu_custom_call.1']
    #allocation10 [shape = 'u8[262144]{0}', space=vmem, size = 0x40000, scoped, tag = 'input window, operand 3, single buffered']
    #allocation11 [shape = 'u8[2048]{0}', space=vmem, size = 0x800, scoped, tag = 'output window, operand 0']
    %11 = vsyncpa [#allocation6], 0
    %s12 = scalar_lea.sflag [#allocation6], 1
    %13 = vsyncpa %s12, 0
    %14 = vsyncpa [#allocation9], 0
    %s15 = scalar_lea.sflag [#allocation9], 1
    %16 = vsyncpa %s15, 0
    %17 = vsyncpa [#allocation7], 0
    %s18 = scalar_lea.sflag [#allocation7], 1
    %19 = vsyncpa %s18, 0
    loop: start=0, step=1, limit=4
    $region2: #{tpu_custom_call.1} parent=1 // loop_pre_header
      _
    $region3: #{tpu_custom_call.1} parent=1 // loop_header
      %s21 = sphi 0, %s25
      %p22 = scmp.ge.s32.totalorder %s21, 4
      %s28 = sphi 0, %s40
      %s29 = sphi 0, %s36
      %s30 = sphi 0, %s28
      %s31 = sphi 0, %s29
      %s32 = sphi 0, %s30
      %s33 = sphi 0, %s31
      %s41 = sphi 0, %s41
      %s43 = sphi 0, %s41
      %s44 = sphi 0, %s43
      %s58 = sphi 0, %s44
      %s66 = sphi 0, %s68
      %s69 = sphi 0, %s66
      %s70 = sphi 0, %s69
      %s86 = sphi 0, %s70
      %s94 = sphi 0, %s96
      %s97 = sphi 0, %s94
      %s98 = sphi 0, %s97
      %s114 = sphi 0, %s98
      %s118 = sphi 0, %s118
      %s120 = sphi 0, %s118
      %s121 = sphi 0, %s120
      %s135 = sphi 0, %s121
      %s139 = sphi 0, %s139
      %s141 = sphi 0, %s139
      %s142 = sphi 0, %s141
      %s156 = sphi 0, %s142
      %s162 = sphi 0, %s164
      %s165 = sphi 0, %s162
      %s166 = sphi 0, %s165
      %s182 = sphi 0, %s166
    $region4: #{tpu_custom_call.1} parent=1 // loop_header_branch
      %24 = sbr.rel (%p22) target = $region8
    $region5: #{tpu_custom_call.1} parent=1 // loop_body
      %s26 = ssub.s32 %s21, 1
      %s27 = ssub.s32 %s21, 2
      %s34 = sadd.s32 1, %s29
      %p35 = scmp.ge.s32.totalorder %s34, 1
      %s36 = scalar_select %p35, 0, %s34
      %s37 = sadd.s32 1, %s28
      %s38 = scalar_select %p35, %s37, %s28
      %p39 = scmp.ge.s32.totalorder %s38, 2
      %s40 = scalar_select %p39, 0, %s38
      %s42 = sadd.s32 %s41, 1
      %p45 = scmp.eq.s32.totalorder %s21, 1
      %p46 = scmp.ne.s32.totalorder %s41, %s43
      %p47 = scmp.eq.s32.totalorder %s21, 0
      %p48 = por %p46, %p47
      %p49 = scmp.ne.s32.totalorder %s41, %s43
      %p50 = scmp.eq.s32.totalorder %s26, 1
      %p51 = por %p49, %p50
      %p52 = scmp.ne.s32.totalorder %s43, %s44
      %p53 = scmp.eq.s32.totalorder %s26, 0
      %p54 = por %p52, %p53
      %p55 = scmp.ne.s32.totalorder %s43, %s44
      %p56 = scmp.eq.s32.totalorder %s27, 1
      %p57 = por %p55, %p56
      %p59 = scmp.ne.s32.totalorder %s44, %s58
      %p60 = scmp.eq.s32.totalorder %s27, 0
      %p61 = por %p59, %p60
      %s62 = ssub.s32 %s28, %s40
      %s63 = ssub.s32 %s29, %s36
      %s64 = sor.u32 %s62, %s63
      %p65 = scmp.eq.s32.totalorder %s64, 0
      %s67 = sadd.s32 %s66, 1
      %s68 = scalar_select %p65, %s66, %s67
      %p71 = pneg %p65
      %p72 = scmp.eq.s32.totalorder %s21, 1
      %p73 = por %p71, %p72
      %p74 = scmp.ne.s32.totalorder %s66, %s69
      %p75 = scmp.eq.s32.totalorder %s21, 0
      %p76 = por %p74, %p75
      %p77 = scmp.ne.s32.totalorder %s66, %s69
      %p78 = scmp.eq.s32.totalorder %s26, 1
      %p79 = por %p77, %p78
      %p80 = scmp.ne.s32.totalorder %s69, %s70
      %p81 = scmp.eq.s32.totalorder %s26, 0
      %p82 = por %p80, %p81
      %p83 = scmp.ne.s32.totalorder %s69, %s70
      %p84 = scmp.eq.s32.totalorder %s27, 1
      %p85 = por %p83, %p84
      %p87 = scmp.ne.s32.totalorder %s70, %s86
      %p88 = scmp.eq.s32.totalorder %s27, 0
      %p89 = por %p87, %p88
      %s90 = ssub.s32 %s28, %s40
      %s91 = ssub.s32 %s29, %s36
      %s92 = sor.u32 %s90, %s91
      %p93 = scmp.eq.s32.totalorder %s92, 0
      %s95 = sadd.s32 %s94, 1
      %s96 = scalar_select %p93, %s94, %s95
      %p99 = pneg %p93
      %p100 = scmp.eq.s32.totalorder %s21, 1
      %p101 = por %p99, %p100
      %p102 = scmp.ne.s32.totalorder %s94, %s97
      %p103 = scmp.eq.s32.totalorder %s21, 0
      %p104 = por %p102, %p103
      %p105 = scmp.ne.s32.totalorder %s94, %s97
      %p106 = scmp.eq.s32.totalorder %s26, 1
      %p107 = por %p105, %p106
      %p108 = scmp.ne.s32.totalorder %s97, %s98
      %p109 = scmp.eq.s32.totalorder %s26, 0
      %p110 = por %p108, %p109
      %p111 = scmp.ne.s32.totalorder %s97, %s98
      %p112 = scmp.eq.s32.totalorder %s27, 1
      %p113 = por %p111, %p112
      %p115 = scmp.ne.s32.totalorder %s98, %s114
      %p116 = scmp.eq.s32.totalorder %s27, 0
      %p117 = por %p115, %p116
      %s119 = sadd.s32 %s118, 1
      %p122 = scmp.eq.s32.totalorder %s21, 1
      %p123 = scmp.ne.s32.totalorder %s118, %s120
      %p124 = scmp.eq.s32.totalorder %s21, 0
      %p125 = por %p123, %p124
      %p126 = scmp.ne.s32.totalorder %s118, %s120
      %p127 = scmp.eq.s32.totalorder %s26, 1
      %p128 = por %p126, %p127
      %p129 = scmp.ne.s32.totalorder %s120, %s121
      %p130 = scmp.eq.s32.totalorder %s26, 0
      %p131 = por %p129, %p130
      %p132 = scmp.ne.s32.totalorder %s120, %s121
      %p133 = scmp.eq.s32.totalorder %s27, 1
      %p134 = por %p132, %p133
      %p136 = scmp.ne.s32.totalorder %s121, %s135
      %p137 = scmp.eq.s32.totalorder %s27, 0
      %p138 = por %p136, %p137
      %s140 = sadd.s32 %s139, 1
      %p143 = scmp.eq.s32.totalorder %s21, 1
      %p144 = scmp.ne.s32.totalorder %s139, %s141
      %p145 = scmp.eq.s32.totalorder %s21, 0
      %p146 = por %p144, %p145
      %p147 = scmp.ne.s32.totalorder %s139, %s141
      %p148 = scmp.eq.s32.totalorder %s26, 1
      %p149 = por %p147, %p148
      %p150 = scmp.ne.s32.totalorder %s141, %s142
      %p151 = scmp.eq.s32.totalorder %s26, 0
      %p152 = por %p150, %p151
      %p153 = scmp.ne.s32.totalorder %s141, %s142
      %p154 = scmp.eq.s32.totalorder %s27, 1
      %p155 = por %p153, %p154
      %p157 = scmp.ne.s32.totalorder %s142, %s156
      %p158 = scmp.eq.s32.totalorder %s27, 0
      %p159 = por %p157, %p158
      %s160 = ssub.s32 %s28, %s40
      %p161 = scmp.eq.s32.totalorder %s160, 0
      %s163 = sadd.s32 %s162, 1
      %s164 = scalar_select %p161, %s162, %s163
      %p167 = pneg %p161
      %p168 = scmp.eq.s32.totalorder %s21, 1
      %p169 = por %p167, %p168
      %p170 = scmp.ne.s32.totalorder %s162, %s165
      %p171 = scmp.eq.s32.totalorder %s21, 0
      %p172 = por %p170, %p171
      %p173 = scmp.ne.s32.totalorder %s162, %s165
      %p174 = scmp.eq.s32.totalorder %s26, 1
      %p175 = por %p173, %p174
      %p176 = scmp.ne.s32.totalorder %s165, %s166
      %p177 = scmp.eq.s32.totalorder %s26, 0
      %p178 = por %p176, %p177
      %p179 = scmp.ne.s32.totalorder %s165, %s166
      %p180 = scmp.eq.s32.totalorder %s27, 1
      %p181 = por %p179, %p180
      %p183 = scmp.ne.s32.totalorder %s166, %s182
      %p184 = scmp.eq.s32.totalorder %s27, 0
      %p185 = por %p183, %p184
      %p186 = scmp.le.s32.totalorder 1, %s21
      %p187 = scmp.lt.s32.totalorder %s21, 3
      %p188 = pnand %p186, %p187
      %p189 = pneg %p188
      // Predicated region
      $region9: #{tpu_custom_call.1} parent=5 // pred_check
        _
      $region10: #{tpu_custom_call.1} parent=5 // pred_check_branch
        %191 = sbr.rel (%p188) target = $region12
      $region11: #{tpu_custom_call.1} parent=5 // pred_region
        %s192 = ssub.s32 %s21, 1
        // Predicated region
        $region13: #{tpu_custom_call.1} parent=11 // pred_check
          %p193 = pneg %p54
        $region14: #{tpu_custom_call.1} parent=11 // pred_check_branch
          %195 = sbr.rel (%p193) target = $region16
        $region15: #{tpu_custom_call.1} parent=11 // pred_region
          _
        $region16: #{tpu_custom_call.1} parent=11 // pred_fallthru
          _
        // Predicated region
        $region17: #{tpu_custom_call.1} parent=11 // pred_check
          %p196 = pneg %p131
        $region18: #{tpu_custom_call.1} parent=11 // pred_check_branch
          %198 = sbr.rel (%p196) target = $region20
        $region19: #{tpu_custom_call.1} parent=11 // pred_region
          %200 = vsyncadd [#allocation9], 0
          %s201 = sshll.u32 %s3, 4
          %s202 = int_to_ptr.hbm [resolvable:$true] %s201
          %s203 = sshll.u32 [#allocation10], 4
          %s204 = int_to_ptr.vmem [resolvable:$true] %s203
          %209 = dma.hbm_to_vmem [thread:$0]  %s202, 8192, %s204, [#allocation9], 256, 256, 16
        $region20: #{tpu_custom_call.1} parent=11 // pred_fallthru
          _
        // Predicated region
        $region21: #{tpu_custom_call.1} parent=11 // pred_check
          %p210 = pneg %p152
        $region22: #{tpu_custom_call.1} parent=11 // pred_check_branch
          %212 = sbr.rel (%p210) target = $region24
        $region23: #{tpu_custom_call.1} parent=11 // pred_region
          _
        $region24: #{tpu_custom_call.1} parent=11 // pred_fallthru
          _
      $region12: #{tpu_custom_call.1} parent=5 // pred_fallthru
        _
      %p213 = scmp.lt.s32.totalorder %s21, 2
      // Predicated region
      $region25: #{tpu_custom_call.1} parent=5 // pred_check
        %p214 = pneg %p213
      $region26: #{tpu_custom_call.1} parent=5 // pred_check_branch
        %216 = sbr.rel (%p214) target = $region28
      $region27: #{tpu_custom_call.1} parent=5 // pred_region
        // Predicated region
        $region29: #{tpu_custom_call.1} parent=27 // pred_check
          %p217 = pneg %p76
        $region30: #{tpu_custom_call.1} parent=27 // pred_check_branch
          %219 = sbr.rel (%p217) target = $region32
        $region31: #{tpu_custom_call.1} parent=27 // pred_region
          %s220 = sand.u32 %s66, 1
          %s221 = scalar_lea.sflag [#allocation6], %s220
          %s222 = sand.u32 %s66, 1
          %s223 = smul.addr %s222, 512
          %s224 = scalar_lea.vmem [#allocation5], %s223
          %s225 = smul.u32 2, %s29
          %227 = vsyncadd %s221, 0
          %s228 = smul.addr %s28, 64
          %s229 = sadd.s32 %s225, %s228
          %s230 = smul.addr %s229, 8
          %s231 = scalar_lea.hbm %s1, %s230
          %s232 = sshll.u32 %s231, 4
          %s233 = int_to_ptr.hbm [resolvable:$true] %s232
          %s234 = sshll.u32 %s224, 4
          %s235 = int_to_ptr.vmem [resolvable:$true] %s234
          %240 = dma.hbm_to_vmem [thread:$0]  %s233, 8192, %s235, %s221, 256, 256, 16
        $region32: #{tpu_custom_call.1} parent=27 // pred_fallthru
          _
        // Predicated region
        $region33: #{tpu_custom_call.1} parent=27 // pred_check
          %p241 = pneg %p104
        $region34: #{tpu_custom_call.1} parent=27 // pred_check_branch
          %243 = sbr.rel (%p241) target = $region36
        $region35: #{tpu_custom_call.1} parent=27 // pred_region
          %s244 = sand.u32 %s21, 1
          %s245 = scalar_lea.sflag [#allocation9], %s244
          %s246 = sand.u32 %s94, 1
          %s247 = smul.addr %s246, 2
          %s248 = scalar_lea.vmem [#allocation8], %s247
          %s249 = smul.u32 2, %s29
          %251 = vsyncadd %s245, 0
          %s252 = smul.addr %s28, 2
          %s253 = sadd.s32 %s249, %s252
          %s254 = scalar_lea.hbm %s2, %s253
          %s256 = sshll.u32 %s254, 4
          %s257 = int_to_ptr.hbm [resolvable:$true] %s256
          %s258 = sshll.u32 %s248, 4
          %s259 = int_to_ptr.vmem [resolvable:$true] %s258
          %261 = dma.hbm_to_vmem [thread:$0]  %s257, 32, %s259, %s245
        $region36: #{tpu_custom_call.1} parent=27 // pred_fallthru
          _
      $region28: #{tpu_custom_call.1} parent=5 // pred_fallthru
        _
      %p262 = scmp.le.s32.totalorder 1, %s21
      %p263 = scmp.lt.s32.totalorder %s21, 3
      %p264 = pnand %p262, %p263
      %p265 = pneg %p264
      // Predicated region
      $region37: #{tpu_custom_call.1} parent=5 // pred_check
        _
      $region38: #{tpu_custom_call.1} parent=5 // pred_check_branch
        %267 = sbr.rel (%p264) target = $region40
      $region39: #{tpu_custom_call.1} parent=5 // pred_region
        %s268 = ssub.s32 %s21, 1
        %s269 = sand.u32 %s69, 1
        %s270 = scalar_lea.sflag [#allocation6], %s269
        %s271 = sand.u32 %s69, 1
        %s272 = smul.addr %s271, 512
        %s273 = scalar_lea.vmem [#allocation5], %s272
        // Predicated region
        $region41: #{tpu_custom_call.1} parent=39 // pred_check
          %p274 = pneg %p82
        $region42: #{tpu_custom_call.1} parent=39 // pred_check_branch
          %276 = sbr.rel (%p274) target = $region44
        $region43: #{tpu_custom_call.1} parent=39 // pred_region
          %278 = dma.done %s270, 8192
        $region44: #{tpu_custom_call.1} parent=39 // pred_fallthru
          _
        %s279 = sand.u32 %s26, 1
        %s280 = scalar_lea.sflag [#allocation9], %s279
        %s281 = sand.u32 %s97, 1
        %s282 = smul.addr %s281, 2
        %s283 = scalar_lea.vmem [#allocation8], %s282
        // Predicated region
        $region45: #{tpu_custom_call.1} parent=39 // pred_check
          %p284 = pneg %p110
        $region46: #{tpu_custom_call.1} parent=39 // pred_check_branch
          %286 = sbr.rel (%p284) target = $region48
        $region47: #{tpu_custom_call.1} parent=39 // pred_region
          %288 = dma.done %s280, 32
        $region48: #{tpu_custom_call.1} parent=39 // pred_fallthru
          _
        // Predicated region
        $region49: #{tpu_custom_call.1} parent=39 // pred_check
          %p289 = pneg %p131
        $region50: #{tpu_custom_call.1} parent=39 // pred_check_branch
          %291 = sbr.rel (%p289) target = $region52
        $region51: #{tpu_custom_call.1} parent=39 // pred_region
          %293 = dma.done [#allocation9], 8192
        $region52: #{tpu_custom_call.1} parent=39 // pred_fallthru
          _
        %p294 = pneg %p54
        %p295 = pneg %p51
        %s296 = sand.u32 %s69, 1
        %s297 = scalar_lea.sflag [#allocation6], %s296
        %s298 = sand.u32 %s69, 1
        %s299 = smul.addr %s298, 512
        %s300 = scalar_lea.vmem [#allocation5], %s299
        %p301 = pneg %p82
        %p302 = pneg %p79
        %s303 = sand.u32 %s26, 1
        %s304 = scalar_lea.sflag [#allocation9], %s303
        %s305 = sand.u32 %s97, 1
        %s306 = smul.addr %s305, 2
        %s307 = scalar_lea.vmem [#allocation8], %s306
        %p308 = pneg %p110
        %p309 = pneg %p107
        %p310 = pneg %p131
        %p311 = pneg %p128
        %p312 = pneg %p152
        %p313 = pneg %p149
        %p314 = pneg %p178
        %p315 = pneg %p175
        %s316 = sand.u32 %s165, 1
        %s317 = scalar_lea.sflag [#allocation7], %s316
        %s318 = sand.u32 %s165, 1
        %s319 = smul.addr %s318, 2
        %s320 = scalar_lea.vmem [#allocation11], %s319
        %s321 = smul.u32 2, %s31
        %s322 = smul.u32 2, %s31
        %p323 = scmp.eq.s32.totalorder %s31, 0
        // Predicated region
        $region53: #{tpu_custom_call.1} parent=39 // pred_check
          %p324 = pneg %p323
        $region54: #{tpu_custom_call.1} parent=39 // pred_check_branch
          %326 = sbr.rel (%p324) target = $region56
        $region55: #{tpu_custom_call.1} parent=39 // pred_region
          %v327 = vlaneseq
          %vm328 = vcmp.ge.s32.totalorder %v327, 0
          %vm329 = vcmp.lt.s32.totalorder %v327, 256
          %vm330 = vmand %vm328, %vm329
          %331 = vst.msk [vmem:[#allocation2] sm:$0x3] %vm330, 0.0
          %vm332 = vcmask 0
          %333 = vst.msk [vmem:[#allocation3] sm:$0x1] %vm332, 0.0
        $region56: #{tpu_custom_call.1} parent=39 // pred_fallthru
          _
        %v334 = vld [vmem:[%s273] sm:$0xff]
        %v335 = vld [vmem:[%s273 + $0x8] sm:$0xff]
        %v336 = vld [vmem:[%s273 + $0x10] sm:$0xff]
        %v337 = vld [vmem:[%s273 + $0x18] sm:$0xff]
        %v338 = vld [vmem:[%s273 + $0x20] sm:$0xff]
        %v339 = vld [vmem:[%s273 + $0x28] sm:$0xff]
        %v340 = vld [vmem:[%s273 + $0x30] sm:$0xff]
        %v341 = vld [vmem:[%s273 + $0x38] sm:$0xff]
        %v342 = vld [vmem:[%s273 + $0x40] sm:$0xff]
        %v343 = vld [vmem:[%s273 + $0x48] sm:$0xff]
        %v344 = vld [vmem:[%s273 + $0x50] sm:$0xff]
        %v345 = vld [vmem:[%s273 + $0x58] sm:$0xff]
        %v346 = vld [vmem:[%s273 + $0x60] sm:$0xff]
        %v347 = vld [vmem:[%s273 + $0x68] sm:$0xff]
        %v348 = vld [vmem:[%s273 + $0x70] sm:$0xff]
        %v349 = vld [vmem:[%s273 + $0x78] sm:$0xff]
        %v350 = vld [vmem:[%s273 + $0x80] sm:$0xff]
        %v351 = vld [vmem:[%s273 + $0x88] sm:$0xff]
        %v352 = vld [vmem:[%s273 + $0x90] sm:$0xff]
        %v353 = vld [vmem:[%s273 + $0x98] sm:$0xff]
        %v354 = vld [vmem:[%s273 + $0xa0] sm:$0xff]
        %v355 = vld [vmem:[%s273 + $0xa8] sm:$0xff]
        %v356 = vld [vmem:[%s273 + $0xb0] sm:$0xff]
        %v357 = vld [vmem:[%s273 + $0xb8] sm:$0xff]
        %v358 = vld [vmem:[%s273 + $0xc0] sm:$0xff]
        %v359 = vld [vmem:[%s273 + $0xc8] sm:$0xff]
        %v360 = vld [vmem:[%s273 + $0xd0] sm:$0xff]
        %v361 = vld [vmem:[%s273 + $0xd8] sm:$0xff]
        %v362 = vld [vmem:[%s273 + $0xe0] sm:$0xff]
        %v363 = vld [vmem:[%s273 + $0xe8] sm:$0xff]
        %v364 = vld [vmem:[%s273 + $0xf0] sm:$0xff]
        %v365 = vld [vmem:[%s273 + $0xf8] sm:$0xff]
        %v366 = vld [vmem:[%s273 + $0x100] sm:$0xff]
        %v367 = vld [vmem:[%s273 + $0x108] sm:$0xff]
        %v368 = vld [vmem:[%s273 + $0x110] sm:$0xff]
        %v369 = vld [vmem:[%s273 + $0x118] sm:$0xff]
        %v370 = vld [vmem:[%s273 + $0x120] sm:$0xff]
        %v371 = vld [vmem:[%s273 + $0x128] sm:$0xff]
        %v372 = vld [vmem:[%s273 + $0x130] sm:$0xff]
        %v373 = vld [vmem:[%s273 + $0x138] sm:$0xff]
        %v374 = vld [vmem:[%s273 + $0x140] sm:$0xff]
        %v375 = vld [vmem:[%s273 + $0x148] sm:$0xff]
        %v376 = vld [vmem:[%s273 + $0x150] sm:$0xff]
        %v377 = vld [vmem:[%s273 + $0x158] sm:$0xff]
        %v378 = vld [vmem:[%s273 + $0x160] sm:$0xff]
        %v379 = vld [vmem:[%s273 + $0x168] sm:$0xff]
        %v380 = vld [vmem:[%s273 + $0x170] sm:$0xff]
        %v381 = vld [vmem:[%s273 + $0x178] sm:$0xff]
        %v382 = vld [vmem:[%s273 + $0x180] sm:$0xff]
        %v383 = vld [vmem:[%s273 + $0x188] sm:$0xff]
        %v384 = vld [vmem:[%s273 + $0x190] sm:$0xff]
        %v385 = vld [vmem:[%s273 + $0x198] sm:$0xff]
        %v386 = vld [vmem:[%s273 + $0x1a0] sm:$0xff]
        %v387 = vld [vmem:[%s273 + $0x1a8] sm:$0xff]
        %v388 = vld [vmem:[%s273 + $0x1b0] sm:$0xff]
        %v389 = vld [vmem:[%s273 + $0x1b8] sm:$0xff]
        %v390 = vld [vmem:[%s273 + $0x1c0] sm:$0xff]
        %v391 = vld [vmem:[%s273 + $0x1c8] sm:$0xff]
        %v392 = vld [vmem:[%s273 + $0x1d0] sm:$0xff]
        %v393 = vld [vmem:[%s273 + $0x1d8] sm:$0xff]
        %v394 = vld [vmem:[%s273 + $0x1e0] sm:$0xff]
        %v395 = vld [vmem:[%s273 + $0x1e8] sm:$0xff]
        %v396 = vld [vmem:[%s273 + $0x1f0] sm:$0xff]
        %v397 = vld [vmem:[%s273 + $0x1f8] sm:$0xff]
        %v398 = vld [vmem:[%s283] sm:$0x3]
        %v399 = vmax.f32 %v334, 1e-06
        %v400 = vmax.f32 %v335, 1e-06
        %v401 = vmax.f32 %v336, 1e-06
        %v402 = vmax.f32 %v337, 1e-06
        %v403 = vmax.f32 %v338, 1e-06
        %v404 = vmax.f32 %v339, 1e-06
        %v405 = vmax.f32 %v340, 1e-06
        %v406 = vmax.f32 %v341, 1e-06
        %v407 = vmax.f32 %v342, 1e-06
        %v408 = vmax.f32 %v343, 1e-06
        %v409 = vmax.f32 %v344, 1e-06
        %v410 = vmax.f32 %v345, 1e-06
        %v411 = vmax.f32 %v346, 1e-06
        %v412 = vmax.f32 %v347, 1e-06
        %v413 = vmax.f32 %v348, 1e-06
        %v414 = vmax.f32 %v349, 1e-06
        %v415 = vmax.f32 %v350, 1e-06
        %v416 = vmax.f32 %v351, 1e-06
        %v417 = vmax.f32 %v352, 1e-06
        %v418 = vmax.f32 %v353, 1e-06
        %v419 = vmax.f32 %v354, 1e-06
        %v420 = vmax.f32 %v355, 1e-06
        %v421 = vmax.f32 %v356, 1e-06
        %v422 = vmax.f32 %v357, 1e-06
        %v423 = vmax.f32 %v358, 1e-06
        %v424 = vmax.f32 %v359, 1e-06
        %v425 = vmax.f32 %v360, 1e-06
        %v426 = vmax.f32 %v361, 1e-06
        %v427 = vmax.f32 %v362, 1e-06
        %v428 = vmax.f32 %v363, 1e-06
        %v429 = vmax.f32 %v364, 1e-06
        %v430 = vmax.f32 %v365, 1e-06
        %v431 = vmax.f32 %v366, 1e-06
        %v432 = vmax.f32 %v367, 1e-06
        %v433 = vmax.f32 %v368, 1e-06
        %v434 = vmax.f32 %v369, 1e-06
        %v435 = vmax.f32 %v370, 1e-06
        %v436 = vmax.f32 %v371, 1e-06
        %v437 = vmax.f32 %v372, 1e-06
        %v438 = vmax.f32 %v373, 1e-06
        %v439 = vmax.f32 %v374, 1e-06
        %v440 = vmax.f32 %v375, 1e-06
        %v441 = vmax.f32 %v376, 1e-06
        %v442 = vmax.f32 %v377, 1e-06
        %v443 = vmax.f32 %v378, 1e-06
        %v444 = vmax.f32 %v379, 1e-06
        %v445 = vmax.f32 %v380, 1e-06
        %v446 = vmax.f32 %v381, 1e-06
        %v447 = vmax.f32 %v382, 1e-06
        %v448 = vmax.f32 %v383, 1e-06
        %v449 = vmax.f32 %v384, 1e-06
        %v450 = vmax.f32 %v385, 1e-06
        %v451 = vmax.f32 %v386, 1e-06
        %v452 = vmax.f32 %v387, 1e-06
        %v453 = vmax.f32 %v388, 1e-06
        %v454 = vmax.f32 %v389, 1e-06
        %v455 = vmax.f32 %v390, 1e-06
        %v456 = vmax.f32 %v391, 1e-06
        %v457 = vmax.f32 %v392, 1e-06
        %v458 = vmax.f32 %v393, 1e-06
        %v459 = vmax.f32 %v394, 1e-06
        %v460 = vmax.f32 %v395, 1e-06
        %v461 = vmax.f32 %v396, 1e-06
        %v462 = vmax.f32 %v397, 1e-06
        %v463 = vmul.f32 %v399, %v399
        %v464 = vmul.f32 %v400, %v400
        %v465 = vmul.f32 %v401, %v401
        %v466 = vmul.f32 %v402, %v402
        %v467 = vmul.f32 %v403, %v403
        %v468 = vmul.f32 %v404, %v404
        %v469 = vmul.f32 %v405, %v405
        %v470 = vmul.f32 %v406, %v406
        %v471 = vmul.f32 %v407, %v407
        %v472 = vmul.f32 %v408, %v408
        %v473 = vmul.f32 %v409, %v409
        %v474 = vmul.f32 %v410, %v410
        %v475 = vmul.f32 %v411, %v411
        %v476 = vmul.f32 %v412, %v412
        %v477 = vmul.f32 %v413, %v413
        %v478 = vmul.f32 %v414, %v414
        %v479 = vmul.f32 %v415, %v415
        %v480 = vmul.f32 %v416, %v416
        %v481 = vmul.f32 %v417, %v417
        %v482 = vmul.f32 %v418, %v418
        %v483 = vmul.f32 %v419, %v419
        %v484 = vmul.f32 %v420, %v420
        %v485 = vmul.f32 %v421, %v421
        %v486 = vmul.f32 %v422, %v422
        %v487 = vmul.f32 %v423, %v423
        %v488 = vmul.f32 %v424, %v424
        %v489 = vmul.f32 %v425, %v425
        %v490 = vmul.f32 %v426, %v426
        %v491 = vmul.f32 %v427, %v427
        %v492 = vmul.f32 %v428, %v428
        %v493 = vmul.f32 %v429, %v429
        %v494 = vmul.f32 %v430, %v430
        %v495 = vmul.f32 %v431, %v431
        %v496 = vmul.f32 %v432, %v432
        %v497 = vmul.f32 %v433, %v433
        %v498 = vmul.f32 %v434, %v434
        %v499 = vmul.f32 %v435, %v435
        %v500 = vmul.f32 %v436, %v436
        %v501 = vmul.f32 %v437, %v437
        %v502 = vmul.f32 %v438, %v438
        %v503 = vmul.f32 %v439, %v439
        %v504 = vmul.f32 %v440, %v440
        %v505 = vmul.f32 %v441, %v441
        %v506 = vmul.f32 %v442, %v442
        %v507 = vmul.f32 %v443, %v443
        %v508 = vmul.f32 %v444, %v444
        %v509 = vmul.f32 %v445, %v445
        %v510 = vmul.f32 %v446, %v446
        %v511 = vmul.f32 %v447, %v447
        %v512 = vmul.f32 %v448, %v448
        %v513 = vmul.f32 %v449, %v449
        %v514 = vmul.f32 %v450, %v450
        %v515 = vmul.f32 %v451, %v451
        %v516 = vmul.f32 %v452, %v452
        %v517 = vmul.f32 %v453, %v453
        %v518 = vmul.f32 %v454, %v454
        %v519 = vmul.f32 %v455, %v455
        %v520 = vmul.f32 %v456, %v456
        %v521 = vmul.f32 %v457, %v457
        %v522 = vmul.f32 %v458, %v458
        %v523 = vmul.f32 %v459, %v459
        %v524 = vmul.f32 %v460, %v460
        %v525 = vmul.f32 %v461, %v461
        %v526 = vmul.f32 %v462, %v462
        %v527 = vmul.f32 %v399, %v463
        %v528 = vmul.f32 %v400, %v464
        %v529 = vmul.f32 %v401, %v465
        %v530 = vmul.f32 %v402, %v466
        %v531 = vmul.f32 %v403, %v467
        %v532 = vmul.f32 %v404, %v468
        %v533 = vmul.f32 %v405, %v469
        %v534 = vmul.f32 %v406, %v470
        %v535 = vmul.f32 %v407, %v471
        %v536 = vmul.f32 %v408, %v472
        %v537 = vmul.f32 %v409, %v473
        %v538 = vmul.f32 %v410, %v474
        %v539 = vmul.f32 %v411, %v475
        %v540 = vmul.f32 %v412, %v476
        %v541 = vmul.f32 %v413, %v477
        %v542 = vmul.f32 %v414, %v478
        %v543 = vmul.f32 %v415, %v479
        %v544 = vmul.f32 %v416, %v480
        %v545 = vmul.f32 %v417, %v481
        %v546 = vmul.f32 %v418, %v482
        %v547 = vmul.f32 %v419, %v483
        %v548 = vmul.f32 %v420, %v484
        %v549 = vmul.f32 %v421, %v485
        %v550 = vmul.f32 %v422, %v486
        %v551 = vmul.f32 %v423, %v487
        %v552 = vmul.f32 %v424, %v488
        %v553 = vmul.f32 %v425, %v489
        %v554 = vmul.f32 %v426, %v490
        %v555 = vmul.f32 %v427, %v491
        %v556 = vmul.f32 %v428, %v492
        %v557 = vmul.f32 %v429, %v493
        %v558 = vmul.f32 %v430, %v494
        %v559 = vmul.f32 %v431, %v495
        %v560 = vmul.f32 %v432, %v496
        %v561 = vmul.f32 %v433, %v497
        %v562 = vmul.f32 %v434, %v498
        %v563 = vmul.f32 %v435, %v499
        %v564 = vmul.f32 %v436, %v500
        %v565 = vmul.f32 %v437, %v501
        %v566 = vmul.f32 %v438, %v502
        %v567 = vmul.f32 %v439, %v503
        %v568 = vmul.f32 %v440, %v504
        %v569 = vmul.f32 %v441, %v505
        %v570 = vmul.f32 %v442, %v506
        %v571 = vmul.f32 %v443, %v507
        %v572 = vmul.f32 %v444, %v508
        %v573 = vmul.f32 %v445, %v509
        %v574 = vmul.f32 %v446, %v510
        %v575 = vmul.f32 %v447, %v511
        %v576 = vmul.f32 %v448, %v512
        %v577 = vmul.f32 %v449, %v513
        %v578 = vmul.f32 %v450, %v514
        %v579 = vmul.f32 %v451, %v515
        %v580 = vmul.f32 %v452, %v516
        %v581 = vmul.f32 %v453, %v517
        %v582 = vmul.f32 %v454, %v518
        %v583 = vmul.f32 %v455, %v519
        %v584 = vmul.f32 %v456, %v520
        %v585 = vmul.f32 %v457, %v521
        %v586 = vmul.f32 %v458, %v522
        %v587 = vmul.f32 %v459, %v523
        %v588 = vmul.f32 %v460, %v524
        %v589 = vmul.f32 %v461, %v525
        %v590 = vmul.f32 %v462, %v526
        %v592 = vperm.slane %v398, 0
        %v593 = vperm.slane %v398, 1
        %596 = vmatpush.xpose.msra.mxu0 %v557
        %597 = vmatpush.xpose.msra.mxu0 %v555
        %598 = vmatpush.xpose.msra.mxu0 %v553
        %599 = vmatpush.xpose.msra.mxu0 %v551
        %600 = vmatpush.xpose.msra.mxu0 %v549
        %601 = vmatpush.xpose.msra.mxu0 %v547
        %602 = vmatpush.xpose.msra.mxu0 %v545
        %603 = vmatpush.xpose.msra.mxu0 %v543
        %604 = vmatpush.xpose.msra.mxu0 %v541
        %605 = vmatpush.xpose.msra.mxu0 %v539
        %606 = vmatpush.xpose.msra.mxu0 %v537
        %607 = vmatpush.xpose.msra.mxu0 %v535
        %608 = vmatpush.xpose.msra.mxu0 %v533
        %609 = vmatpush.xpose.msra.mxu0 %v531
        %610 = vmatpush.xpose.msra.mxu0 %v529
        %611 = vmatpush.xpose.msra.mxu0 %v527
        %612 = vmatmul.f32.gmra.mxu0 %v592
        %v613 = vpop.f32.mrf.mxu0
        %v614 = vadd.f32 0.0, %v613
        %615 = vdwg.mxu0
        %616 = vmatpush.xpose.msra.mxu0 %v558
        %617 = vmatpush.xpose.msra.mxu0 %v556
        %618 = vmatpush.xpose.msra.mxu0 %v554
        %619 = vmatpush.xpose.msra.mxu0 %v552
        %620 = vmatpush.xpose.msra.mxu0 %v550
        %621 = vmatpush.xpose.msra.mxu0 %v548
        %622 = vmatpush.xpose.msra.mxu0 %v546
        %623 = vmatpush.xpose.msra.mxu0 %v544
        %624 = vmatpush.xpose.msra.mxu0 %v542
        %625 = vmatpush.xpose.msra.mxu0 %v540
        %626 = vmatpush.xpose.msra.mxu0 %v538
        %627 = vmatpush.xpose.msra.mxu0 %v536
        %628 = vmatpush.xpose.msra.mxu0 %v534
        %629 = vmatpush.xpose.msra.mxu0 %v532
        %630 = vmatpush.xpose.msra.mxu0 %v530
        %631 = vmatpush.xpose.msra.mxu0 %v528
        %632 = vmatmul.f32.gmra.mxu0 %v593
        %v633 = vpop.f32.mrf.mxu0
        %v634 = vadd.f32 %v614, %v633
        %635 = vdwg.mxu0
        %636 = vmatpush.xpose.msra.mxu0 %v589
        %637 = vmatpush.xpose.msra.mxu0 %v587
        %638 = vmatpush.xpose.msra.mxu0 %v585
        %639 = vmatpush.xpose.msra.mxu0 %v583
        %640 = vmatpush.xpose.msra.mxu0 %v581
        %641 = vmatpush.xpose.msra.mxu0 %v579
        %642 = vmatpush.xpose.msra.mxu0 %v577
        %643 = vmatpush.xpose.msra.mxu0 %v575
        %644 = vmatpush.xpose.msra.mxu0 %v573
        %645 = vmatpush.xpose.msra.mxu0 %v571
        %646 = vmatpush.xpose.msra.mxu0 %v569
        %647 = vmatpush.xpose.msra.mxu0 %v567
        %648 = vmatpush.xpose.msra.mxu0 %v565
        %649 = vmatpush.xpose.msra.mxu0 %v563
        %650 = vmatpush.xpose.msra.mxu0 %v561
        %651 = vmatpush.xpose.msra.mxu0 %v559
        %652 = vmatmul.f32.gmra.mxu0 %v592
        %v653 = vpop.f32.mrf.mxu0
        %v654 = vadd.f32 0.0, %v653
        %655 = vdwg.mxu0
        %656 = vmatpush.xpose.msra.mxu0 %v590
        %657 = vmatpush.xpose.msra.mxu0 %v588
        %658 = vmatpush.xpose.msra.mxu0 %v586
        %659 = vmatpush.xpose.msra.mxu0 %v584
        %660 = vmatpush.xpose.msra.mxu0 %v582
        %661 = vmatpush.xpose.msra.mxu0 %v580
        %662 = vmatpush.xpose.msra.mxu0 %v578
        %663 = vmatpush.xpose.msra.mxu0 %v576
        %664 = vmatpush.xpose.msra.mxu0 %v574
        %665 = vmatpush.xpose.msra.mxu0 %v572
        %666 = vmatpush.xpose.msra.mxu0 %v570
        %667 = vmatpush.xpose.msra.mxu0 %v568
        %668 = vmatpush.xpose.msra.mxu0 %v566
        %669 = vmatpush.xpose.msra.mxu0 %v564
        %670 = vmatpush.xpose.msra.mxu0 %v562
        %671 = vmatpush.xpose.msra.mxu0 %v560
        %672 = vmatmul.f32.gmra.mxu0 %v593
        %v673 = vpop.f32.mrf.mxu0
        %v674 = vadd.f32 %v654, %v673
        %675 = vdwg.mxu0
        %v676 = vld [vmem:[#allocation2] sm:$0x3]
        %v679 = vrot.slane %v674, 7
        %vm680 = vcmask 1040384
        %v681 = vsel %vm680, %v634, %v679
        %v683 = vadd.f32 %v676, %v681
        %v684 = vlaneseq
        %vm685 = vcmp.ge.s32.totalorder %v684, 0
        %vm686 = vcmp.lt.s32.totalorder %v684, 256
        %vm687 = vmand %vm685, %vm686
        %688 = vst.msk [vmem:[#allocation2] sm:$0x3] %vm687, %v683
        %v689 = vld [vmem:[#allocation3] sm:$0x1]
        %v690 = vsel %vm680, %v592, 0.0
        %v691 = vsel %vm680, %v593, 0.0
        %v692 = vadd.f32 %v690, %v691
        %693 = vadd.xlane.f32.xlu0 %v692
        %v694 = vpop.xlane.xlu0 %693
        %v695 = vadd.f32 %v689, %v694
        %vm696 = vcmask 0
        %697 = vst.msk [vmem:[#allocation3] sm:$0x1] %vm696, %v695
        // Predicated region
        $region57: #{tpu_custom_call.1} parent=39 // pred_check
          %p698 = pneg %p323
        $region58: #{tpu_custom_call.1} parent=39 // pred_check_branch
          %700 = sbr.rel (%p698) target = $region60
        $region59: #{tpu_custom_call.1} parent=39 // pred_region
          %v701 = vld [vmem:[#allocation2] sm:$0x3]
          %v702 = vld [vmem:[#allocation3] sm:$0x1]
          %704 = vset.pattern.permute.xlu0 0
          %705 = vperm.xlu0 %704, %v702
          %v706 = vpop.permute.xlu0 %705
          %v708 = vperm.slane %v706, 0
          %v709 = vrcp.pop %v708
          %v710 = vmul.f32 %v708, %v709
          %v711 = vsub.f32 1.0, %v710
          %v712 = vmul.f32 %v709, %v711
          %v713 = vadd.f32 %v709, %v712
          %vm714 = vweird.f32 %v708
          %vm715 = vweird.f32 %v709
          %vm716 = vmor %vm714, %vm715
          %v717 = vsel %vm716, %v709, %v713
          %v718 = vand.u32 2147483647, %v708
          %vm719 = vcmp.eq.f32.partialorder %v718, 8.507059e+37
          %v720 = vand.u32 %v708, 2147483648
          %v721 = vor.u32 1.1754944e-38, %v720
          %v722 = vsel %vm719, %v721, %v717
          %v723 = vmul.f32 %v701, %v722
          %v724 = vlog2.pop %v723
          %v725 = vmul.f32 %v724, 0.6931472
          %v726 = vmul.f32 %v725, 0.33333334
          %v727 = vmul.f32 %v726, 1.442695
          %v728 = vpow.pop %v727
          %v729 = vld [vmem:[#allocation10] sm:$0xff]
          %v730 = vld [vmem:[#allocation10 + $0x8] sm:$0xff]
          %v731 = vld [vmem:[#allocation10 + $0x10] sm:$0xff]
          %v732 = vld [vmem:[#allocation10 + $0x18] sm:$0xff]
          %v733 = vld [vmem:[#allocation10 + $0x20] sm:$0xff]
          %v734 = vld [vmem:[#allocation10 + $0x28] sm:$0xff]
          %v735 = vld [vmem:[#allocation10 + $0x30] sm:$0xff]
          %v736 = vld [vmem:[#allocation10 + $0x38] sm:$0xff]
          %v737 = vld [vmem:[#allocation10 + $0x40] sm:$0xff]
          %v738 = vld [vmem:[#allocation10 + $0x48] sm:$0xff]
          %v739 = vld [vmem:[#allocation10 + $0x50] sm:$0xff]
          %v740 = vld [vmem:[#allocation10 + $0x58] sm:$0xff]
          %v741 = vld [vmem:[#allocation10 + $0x60] sm:$0xff]
          %v742 = vld [vmem:[#allocation10 + $0x68] sm:$0xff]
          %v743 = vld [vmem:[#allocation10 + $0x70] sm:$0xff]
          %v744 = vld [vmem:[#allocation10 + $0x78] sm:$0xff]
          %v745 = vld [vmem:[#allocation10 + $0x80] sm:$0xff]
          %v746 = vld [vmem:[#allocation10 + $0x88] sm:$0xff]
          %v747 = vld [vmem:[#allocation10 + $0x90] sm:$0xff]
          %v748 = vld [vmem:[#allocation10 + $0x98] sm:$0xff]
          %v749 = vld [vmem:[#allocation10 + $0xa0] sm:$0xff]
          %v750 = vld [vmem:[#allocation10 + $0xa8] sm:$0xff]
          %v751 = vld [vmem:[#allocation10 + $0xb0] sm:$0xff]
          %v752 = vld [vmem:[#allocation10 + $0xb8] sm:$0xff]
          %v753 = vld [vmem:[#allocation10 + $0xc0] sm:$0xff]
          %v754 = vld [vmem:[#allocation10 + $0xc8] sm:$0xff]
          %v755 = vld [vmem:[#allocation10 + $0xd0] sm:$0xff]
          %v756 = vld [vmem:[#allocation10 + $0xd8] sm:$0xff]
          %v757 = vld [vmem:[#allocation10 + $0xe0] sm:$0xff]
          %v758 = vld [vmem:[#allocation10 + $0xe8] sm:$0xff]
          %v759 = vld [vmem:[#allocation10 + $0xf0] sm:$0xff]
          %v760 = vld [vmem:[#allocation10 + $0xf8] sm:$0xff]
          %v761 = vld [vmem:[#allocation10 + $0x100] sm:$0xff]
          %v762 = vld [vmem:[#allocation10 + $0x108] sm:$0xff]
          %v763 = vld [vmem:[#allocation10 + $0x110] sm:$0xff]
          %v764 = vld [vmem:[#allocation10 + $0x118] sm:$0xff]
          %v765 = vld [vmem:[#allocation10 + $0x120] sm:$0xff]
          %v766 = vld [vmem:[#allocation10 + $0x128] sm:$0xff]
          %v767 = vld [vmem:[#allocation10 + $0x130] sm:$0xff]
          %v768 = vld [vmem:[#allocation10 + $0x138] sm:$0xff]
          %v769 = vld [vmem:[#allocation10 + $0x140] sm:$0xff]
          %v770 = vld [vmem:[#allocation10 + $0x148] sm:$0xff]
          %v771 = vld [vmem:[#allocation10 + $0x150] sm:$0xff]
          %v772 = vld [vmem:[#allocation10 + $0x158] sm:$0xff]
          %v773 = vld [vmem:[#allocation10 + $0x160] sm:$0xff]
          %v774 = vld [vmem:[#allocation10 + $0x168] sm:$0xff]
          %v775 = vld [vmem:[#allocation10 + $0x170] sm:$0xff]
          %v776 = vld [vmem:[#allocation10 + $0x178] sm:$0xff]
          %v777 = vld [vmem:[#allocation10 + $0x180] sm:$0xff]
          %v778 = vld [vmem:[#allocation10 + $0x188] sm:$0xff]
          %v779 = vld [vmem:[#allocation10 + $0x190] sm:$0xff]
          %v780 = vld [vmem:[#allocation10 + $0x198] sm:$0xff]
          %v781 = vld [vmem:[#allocation10 + $0x1a0] sm:$0xff]
          %v782 = vld [vmem:[#allocation10 + $0x1a8] sm:$0xff]
          %v783 = vld [vmem:[#allocation10 + $0x1b0] sm:$0xff]
          %v784 = vld [vmem:[#allocation10 + $0x1b8] sm:$0xff]
          %v785 = vld [vmem:[#allocation10 + $0x1c0] sm:$0xff]
          %v786 = vld [vmem:[#allocation10 + $0x1c8] sm:$0xff]
          %v787 = vld [vmem:[#allocation10 + $0x1d0] sm:$0xff]
          %v788 = vld [vmem:[#allocation10 + $0x1d8] sm:$0xff]
          %v789 = vld [vmem:[#allocation10 + $0x1e0] sm:$0xff]
          %v790 = vld [vmem:[#allocation10 + $0x1e8] sm:$0xff]
          %v791 = vld [vmem:[#allocation10 + $0x1f0] sm:$0xff]
          %v792 = vld [vmem:[#allocation10 + $0x1f8] sm:$0xff]
          %v793 = vld [vmem:[%s4] sm:$0x3]
          %v795 = vperm.slane %v728, 0
          %v796 = vperm.slane %v728, 1
          %v800 = vperm.slane %v793, 0
          %v801 = vperm.slane %v793, 1
          %804 = vmatpush.msra.mxu0 %v759
          %805 = vmatpush.msra.mxu0 %v757
          %806 = vmatpush.msra.mxu0 %v755
          %807 = vmatpush.msra.mxu0 %v753
          %808 = vmatpush.msra.mxu0 %v751
          %809 = vmatpush.msra.mxu0 %v749
          %810 = vmatpush.msra.mxu0 %v747
          %811 = vmatpush.msra.mxu0 %v745
          %812 = vmatpush.msra.mxu0 %v743
          %813 = vmatpush.msra.mxu0 %v741
          %814 = vmatpush.msra.mxu0 %v739
          %815 = vmatpush.msra.mxu0 %v737
          %816 = vmatpush.msra.mxu0 %v735
          %817 = vmatpush.msra.mxu0 %v733
          %818 = vmatpush.msra.mxu0 %v731
          %819 = vmatpush.msra.mxu0 %v729
          %820 = vmatmul.f32.gmra.mxu0 %v795
          %v821 = vpop.f32.mrf.mxu0
          %v822 = vadd.f32 %v800, %v821
          %823 = vdwg.mxu0
          %824 = vmatpush.msra.mxu0 %v791
          %825 = vmatpush.msra.mxu0 %v789
          %826 = vmatpush.msra.mxu0 %v787
          %827 = vmatpush.msra.mxu0 %v785
          %828 = vmatpush.msra.mxu0 %v783
          %829 = vmatpush.msra.mxu0 %v781
          %830 = vmatpush.msra.mxu0 %v779
          %831 = vmatpush.msra.mxu0 %v777
          %832 = vmatpush.msra.mxu0 %v775
          %833 = vmatpush.msra.mxu0 %v773
          %834 = vmatpush.msra.mxu0 %v771
          %835 = vmatpush.msra.mxu0 %v769
          %836 = vmatpush.msra.mxu0 %v767
          %837 = vmatpush.msra.mxu0 %v765
          %838 = vmatpush.msra.mxu0 %v763
          %839 = vmatpush.msra.mxu0 %v761
          %840 = vmatmul.f32.gmra.mxu0 %v796
          %v841 = vpop.f32.mrf.mxu0
          %v842 = vadd.f32 %v822, %v841
          %843 = vdwg.mxu0
          %844 = vmatpush.msra.mxu0 %v760
          %845 = vmatpush.msra.mxu0 %v758
          %846 = vmatpush.msra.mxu0 %v756
          %847 = vmatpush.msra.mxu0 %v754
          %848 = vmatpush.msra.mxu0 %v752
          %849 = vmatpush.msra.mxu0 %v750
          %850 = vmatpush.msra.mxu0 %v748
          %851 = vmatpush.msra.mxu0 %v746
          %852 = vmatpush.msra.mxu0 %v744
          %853 = vmatpush.msra.mxu0 %v742
          %854 = vmatpush.msra.mxu0 %v740
          %855 = vmatpush.msra.mxu0 %v738
          %856 = vmatpush.msra.mxu0 %v736
          %857 = vmatpush.msra.mxu0 %v734
          %858 = vmatpush.msra.mxu0 %v732
          %859 = vmatpush.msra.mxu0 %v730
          %860 = vmatmul.f32.gmra.mxu0 %v795
          %v861 = vpop.f32.mrf.mxu0
          %v862 = vadd.f32 %v801, %v861
          %863 = vdwg.mxu0
          %864 = vmatpush.msra.mxu0 %v792
          %865 = vmatpush.msra.mxu0 %v790
          %866 = vmatpush.msra.mxu0 %v788
          %867 = vmatpush.msra.mxu0 %v786
          %868 = vmatpush.msra.mxu0 %v784
          %869 = vmatpush.msra.mxu0 %v782
          %870 = vmatpush.msra.mxu0 %v780
          %871 = vmatpush.msra.mxu0 %v778
          %872 = vmatpush.msra.mxu0 %v776
          %873 = vmatpush.msra.mxu0 %v774
          %874 = vmatpush.msra.mxu0 %v772
          %875 = vmatpush.msra.mxu0 %v770
          %876 = vmatpush.msra.mxu0 %v768
          %877 = vmatpush.msra.mxu0 %v766
          %878 = vmatpush.msra.mxu0 %v764
          %879 = vmatpush.msra.mxu0 %v762
          %880 = vmatmul.f32.gmra.mxu0 %v796
          %v881 = vpop.f32.mrf.mxu0
          %v882 = vadd.f32 %v862, %v881
          %883 = vdwg.mxu0
          %v886 = vrot.slane %v882, 7
          %v887 = vsel %vm680, %v842, %v886
          %889 = vst.msk [vmem:[%s320] sm:$0x3] %vm687, %v887
        $region60: #{tpu_custom_call.1} parent=39 // pred_fallthru
          _
        %s890 = sand.u32 %s165, 1
        %s891 = scalar_lea.sflag [#allocation7], %s890
        %s892 = sand.u32 %s165, 1
        %s893 = smul.addr %s892, 2
        %s894 = scalar_lea.vmem [#allocation11], %s893
        // Predicated region
        $region61: #{tpu_custom_call.1} parent=39 // pred_check
          %p895 = pneg %p175
        $region62: #{tpu_custom_call.1} parent=39 // pred_check_branch
          %897 = sbr.rel (%p895) target = $region64
        $region63: #{tpu_custom_call.1} parent=39 // pred_region
          %899 = vsyncadd %s891, 0
          %s900 = smul.addr %s30, 2
          %s901 = scalar_lea.hbm %s5, %s900
          %s903 = sshll.u32 %s894, 4
          %s904 = int_to_ptr.vmem [resolvable:$true] %s903
          %s905 = sshll.u32 %s901, 4
          %s906 = int_to_ptr.hbm [resolvable:$true] %s905
          %908 = dma.vmem_to_hbm [thread:$0]  %s904, 32, %s906, %s891
        $region64: #{tpu_custom_call.1} parent=39 // pred_fallthru
          _
      $region40: #{tpu_custom_call.1} parent=5 // pred_fallthru
        _
      %p909 = scmp.le.s32.totalorder 2, %s21
      // Predicated region
      $region65: #{tpu_custom_call.1} parent=5 // pred_check
        %p910 = pneg %p909
      $region66: #{tpu_custom_call.1} parent=5 // pred_check_branch
        %912 = sbr.rel (%p910) target = $region68
      $region67: #{tpu_custom_call.1} parent=5 // pred_region
        %s913 = ssub.s32 %s21, 2
        // Predicated region
        $region69: #{tpu_custom_call.1} parent=67 // pred_check
          %p914 = pneg %p181
        $region70: #{tpu_custom_call.1} parent=67 // pred_check_branch
          %916 = sbr.rel (%p914) target = $region72
        $region71: #{tpu_custom_call.1} parent=67 // pred_region
          %s917 = sand.u32 %s166, 1
          %s918 = scalar_lea.sflag [#allocation7], %s917
          %s919 = sand.u32 %s166, 1
          %s920 = smul.addr %s919, 2
          %s921 = scalar_lea.vmem [#allocation11], %s920
          %923 = dma.done %s918, 32
        $region72: #{tpu_custom_call.1} parent=67 // pred_fallthru
          _
      $region68: #{tpu_custom_call.1} parent=5 // pred_fallthru
        _
    $region6: #{tpu_custom_call.1} parent=1 // loop_footer
      %s25 = sadd.s32 1, %s21
    $region7: #{tpu_custom_call.1} parent=1 // loop_footer_branch
      %20 = sbr.rel target = $region3
    $region8: #{tpu_custom_call.1} parent=1 // loop_exit
      _
    %924 = vsyncpa [#allocation6], 1
    %s925 = scalar_lea.sflag [#allocation6], 1
    %926 = vsyncpa %s925, 1
    %927 = vsyncpa [#allocation9], 1
    %s928 = scalar_lea.sflag [#allocation9], 1
    %929 = vsyncpa %s928, 1
    %930 = vsyncpa [#allocation7], 1
    %s931 = scalar_lea.sflag [#allocation7], 1
    %932 = vsyncpa %s931, 1

</llo_original>
